<compile_context>
chip_gen: v6e
topology: v6e:2x2x1
jax: 0.10.0
libtpu: 0.0.40
codegen_flags: <defaults>
</compile_context>

<pallas_src>
import functools

import jax
import jax.numpy as jnp
from jax.experimental import pallas as pl
from jax.experimental.pallas import tpu as pltpu


_MIN_GRID_STEPS = 4  # keep the pipeline fed when the input is large enough


def _encoder_layernorm_kernel(x_ref, alpha_ref, bias_ref, o_ref, *, eps, features):
    # x_ref block: (TM, F); alpha/bias block: (1, F)
    x = x_ref[...].astype(jnp.float32)
    mean = jnp.mean(x, axis=-1, keepdims=True)

    # Variance pass: unbiased (divide by N-1), matching torch.std.
    # (features == 1 yields inf/NaN exactly like torch.std with ddof=1.)
    d = x - mean
    var = jnp.sum(d * d, axis=-1, keepdims=True) * jnp.float32(1.0 / (features - 1))
    std = jnp.sqrt(var)

    # Per-row reciprocal on a (TM, 1) value instead of a (TM, F) divide.
    inv = pl.reciprocal(std + jnp.float32(eps), approx=False)

    alpha = alpha_ref[...].astype(jnp.float32)
    bias = bias_ref[...].astype(jnp.float32)

    # Epilogue is exactly sub, mul, mul, add per element.  (x - mean) is
    # re-expressed here so the compiler is free to recompute rather than keep
    # a second full (TM, F) f32 temporary alive across the reduction above.
    out = (x - mean) * inv * alpha + bias
    o_ref[...] = out.astype(o_ref.dtype)


def _vmem_budget_bytes():
    """Total bytes we allow for (2x in + 2x out buffers + f32 temps) per step.

    Stays under the scoped-VMEM *default* of each generation so no
    vmem_limit_bytes override is needed:
      v5e: 16 MiB scoped default -> budget 14 MiB
      v6e: 32 MiB scoped default -> budget 28 MiB
      v7x: 64 MiB physical / 32 MiB scoped default -> budget 22 MiB
    Unknown generations fall back to the conservative 14 MiB.
    """
    kind = ""
    try:
        kind = jax.devices()[0].device_kind.lower()
    except Exception:  # pragma: no cover - defensive; keep the kernel usable
        pass
    if "v5" in kind:
        return 14 * 1024 * 1024
    if "v6" in kind or "6e" in kind or "6 lite" in kind:
        return 28 * 1024 * 1024
    if "7" in kind:
        return 22 * 1024 * 1024
    return 14 * 1024 * 1024


def _pick_row_tile(rows, features, dtype):
    """Pick the row-tile size TM for a (rows, features) layout.

    Budget (per grid step): 2x input + 2x output double-buffers in the input
    dtype plus ~2 live (TM, F) f32 temporaries inside the kernel.
    """
    itemsize = jnp.dtype(dtype).itemsize
    # sublane packing: 8 rows / vreg for 32-bit, 16 for 16-bit, 32 for 8-bit
    sub = {4: 8, 2: 16, 1: 32}.get(itemsize, 8)

    budget = _vmem_budget_bytes()
    bytes_per_row = features * (4 * itemsize + 2 * 4)
    tm = max(sub, budget // max(bytes_per_row, 1))

    # Keep >= _MIN_GRID_STEPS grid steps so DMA/compute actually overlap
    # (a 1-2 step grid leaves the loads and stores fully exposed).
    if rows > _MIN_GRID_STEPS * sub:
        tm = min(tm, rows // _MIN_GRID_STEPS)

    tm = max(sub, (tm // sub) * sub)
    if rows <= tm:
        # Single block covering all rows: block dim == full array dim is
        # always a legal block shape regardless of the (8, 128) rule.
        return rows
    return tm


def encoder_forward(x, mask, alpha, bias, *, eps=1e-6, row_block=None):
    """Encoder.forward: (no encoder blocks given) -> final LayerNormalization.

    x:     (B, S, F)
    mask:  unused here (would be consumed by the encoder blocks)
    alpha: (F,)  scale
    bias:  (F,)  shift
    row_block: optional override of the row-tile size (testing / tuning).
    """
    del mask  # consumed only by the (unspecified) encoder blocks
    B, S, F = x.shape

    # TODO(synk): loop over encoder blocks would go here; none are defined.

    rows = B * S
    x2 = x.reshape(rows, F)
    alpha2 = alpha.reshape(1, F)
    bias2 = bias.reshape(1, F)

    tm = row_block if row_block is not None else _pick_row_tile(rows, F, x.dtype)
    grid = (pl.cdiv(rows, tm),)
    # If rows % tm != 0, Pallas pads the last block.  The computation is fully
    # row-independent (the only reduction is along F), so padded rows cannot
    # corrupt valid rows, and their stores are masked.

    kernel = functools.partial(_encoder_layernorm_kernel, eps=eps, features=F)

    out2 = pl.pallas_call(
        kernel,
        out_shape=jax.ShapeDtypeStruct((rows, F), x.dtype),
        grid_spec=pltpu.PrefetchScalarGridSpec(
            num_scalar_prefetch=0,
            grid=grid,
            in_specs=[
                pl.BlockSpec((tm, F), lambda i: (i, 0)),
                pl.BlockSpec((1, F), lambda i: (0, 0)),   # stays VMEM-resident
                pl.BlockSpec((1, F), lambda i: (0, 0)),   # stays VMEM-resident
            ],
            out_specs=pl.BlockSpec((tm, F), lambda i: (i, 0)),
        ),
        compiler_params=pltpu.CompilerParams(
            # Row axis is independent work; "parallel" lets megacore-capable
            # parts (v7x, 2 TCs) shard it.  TODO(synk): if a v7x bundle shows
            # one idle TC, switch this axis to pltpu.CORE_PARALLEL.
            dimension_semantics=("parallel",),
        ),
    )(x2, alpha2, bias2)

    return out2.reshape(B, S, F)


def encoder_forward_ref(x, mask, alpha, bias, *, eps=1e-6):
    """Plain-JAX reference mirroring the PyTorch module."""
    del mask
    xf = x.astype(jnp.float32)
    mean = jnp.mean(xf, axis=-1, keepdims=True)
    var = jnp.sum((xf - mean) ** 2, axis=-1, keepdims=True) / (x.shape[-1] - 1)
    std = jnp.sqrt(var)
    return (alpha * (xf - mean) / (std + eps) + bias).astype(x.dtype)


if __name__ == "__main__":
    key = jax.random.PRNGKey(0)
    kx, ka, kb, kx2, ka2, kb2 = jax.random.split(key, 6)

    # --- main test: small shapes consistent with the module -----------------
    B, S, F = 2, 8, 32  # batch, seq, features
    x = jax.random.normal(kx, (B, S, F), dtype=jnp.float32)
    mask = jnp.ones((B, 1, 1, S), dtype=jnp.float32)  # attn-mask shape convention

    # Parameters of LayerNormalization(features=F): alpha init=ones, bias init=zeros.
    # Perturbed deterministically so scale/shift are actually exercised.
    alpha = jnp.ones((F,), jnp.float32) + 0.1 * jax.random.normal(ka, (F,), jnp.float32)
    bias = jnp.zeros((F,), jnp.float32) + 0.1 * jax.random.normal(kb, (F,), jnp.float32)

    out = encoder_forward(x, mask, alpha, bias)
    out = jax.block_until_ready(out)
    ref = encoder_forward_ref(x, mask, alpha, bias)
    assert out.shape == (B, S, F)
    assert jnp.allclose(out, ref, atol=1e-5, rtol=1e-5), "mismatch vs reference"

    # --- second test: lane-dense F, multi-step grid, partial last block -----
    B2, S2, F2 = 2, 36, 128          # rows = 72, forced tile 16 -> 4 full + 1 partial
    x2 = jax.random.normal(kx2, (B2, S2, F2), dtype=jnp.float32)
    mask2 = jnp.ones((B2, 1, 1, S2), dtype=jnp.float32)
    alpha2 = jnp.ones((F2,), jnp.float32) + 0.1 * jax.random.normal(ka2, (F2,), jnp.float32)
    bias2 = jnp.zeros((F2,), jnp.float32) + 0.1 * jax.random.normal(kb2, (F2,), jnp.float32)

    out2 = encoder_forward(x2, mask2, alpha2, bias2, row_block=16)
    out2 = jax.block_until_ready(out2)
    ref2 = encoder_forward_ref(x2, mask2, alpha2, bias2)
    assert out2.shape == (B2, S2, F2)
    assert jnp.allclose(out2, ref2, atol=1e-5, rtol=1e-5), "mismatch vs reference (partial block)"

    print("KERNEL_OK")
</pallas_src>

<mosaic_0001>
module attributes {stable_mosaic.version = 11 : i64} {
  func.func @_encoder_layernorm_kernel(%arg0: i32, %arg1: memref<16x32xf32, #tpu.memory_space<vmem>>, %arg2: memref<1x32xf32, #tpu.memory_space<vmem>>, %arg3: memref<1x32xf32, #tpu.memory_space<vmem>>, %arg4: memref<16x32xf32, #tpu.memory_space<vmem>>) attributes {dimension_semantics = [#tpu.dimension_semantics<parallel>], iteration_bounds = array<i64: 1>, scalar_prefetch = 0 : i64, scratch_operands = 0 : i64, tpu.core_type = #tpu.core_type<tc>, window_params = [{transform_indices = @transform_0, window_bounds = array<i64: 16, 32>}, {pipeline_mode = #tpu.pipeline_mode<synchronous>, transform_indices = @transform_1, window_bounds = array<i64: 1, 32>}, {pipeline_mode = #tpu.pipeline_mode<synchronous>, transform_indices = @transform_2, window_bounds = array<i64: 1, 32>}, {transform_indices = @transform_3, window_bounds = array<i64: 16, 32>}]} {
    %c0 = arith.constant 0 : index
    %c0_0 = arith.constant 0 : index
    %0 = vector.load %arg1[%c0, %c0_0] : memref<16x32xf32, #tpu.memory_space<vmem>>, vector<16x32xf32>
    %cst = arith.constant dense<0.000000e+00> : vector<16xf32>
    %1 = vector.multi_reduction <add>, %0, %cst [1] : vector<16x32xf32> to vector<16xf32>
    %2 = vector.shape_cast %1 : vector<16xf32> to vector<16x1xf32>
    %cst_1 = arith.constant 3.200000e+01 : f32
    %3 = vector.broadcast %cst_1 : f32 to vector<16x1xf32>
    %4 = arith.divf %2, %3 : vector<16x1xf32>
    %5 = vector.broadcast %4 : vector<16x1xf32> to vector<16x32xf32>
    %6 = arith.subf %0, %5 : vector<16x32xf32>
    %7 = arith.mulf %6, %6 : vector<16x32xf32>
    %cst_2 = arith.constant dense<0.000000e+00> : vector<16xf32>
    %8 = vector.multi_reduction <add>, %7, %cst_2 [1] : vector<16x32xf32> to vector<16xf32>
    %9 = vector.shape_cast %8 : vector<16xf32> to vector<16x1xf32>
    %cst_3 = arith.constant 0.0322580636 : f32
    %10 = vector.broadcast %cst_3 : f32 to vector<16x1xf32>
    %11 = arith.mulf %9, %10 : vector<16x1xf32>
    %12 = math.sqrt %11 : vector<16x1xf32>
    %cst_4 = arith.constant 9.99999997E-7 : f32
    %13 = vector.broadcast %cst_4 : f32 to vector<16x1xf32>
    %14 = arith.addf %12, %13 : vector<16x1xf32>
    %15 = tpu.reciprocal %14 : vector<16x1xf32> -> vector<16x1xf32>
    %c0_5 = arith.constant 0 : index
    %c0_6 = arith.constant 0 : index
    %16 = vector.load %arg2[%c0_5, %c0_6] : memref<1x32xf32, #tpu.memory_space<vmem>>, vector<1x32xf32>
    %c0_7 = arith.constant 0 : index
    %c0_8 = arith.constant 0 : index
    %17 = vector.load %arg3[%c0_7, %c0_8] : memref<1x32xf32, #tpu.memory_space<vmem>>, vector<1x32xf32>
    %18 = vector.broadcast %4 : vector<16x1xf32> to vector<16x32xf32>
    %19 = arith.subf %0, %18 : vector<16x32xf32>
    %20 = vector.broadcast %15 : vector<16x1xf32> to vector<16x32xf32>
    %21 = arith.mulf %19, %20 : vector<16x32xf32>
    %22 = vector.broadcast %16 : vector<1x32xf32> to vector<16x32xf32>
    %23 = arith.mulf %21, %22 : vector<16x32xf32>
    %24 = vector.broadcast %17 : vector<1x32xf32> to vector<16x32xf32>
    %25 = arith.addf %23, %24 : vector<16x32xf32>
    %c0_9 = arith.constant 0 : index
    %c0_10 = arith.constant 0 : index
    %26 = vector.load %arg4[%c0_9, %c0_10] : memref<16x32xf32, #tpu.memory_space<vmem>>, vector<16x32xf32>
    tpu.vector_store %arg4[%c0_9, %c0_10], %25 {strides = array<i32>} : memref<16x32xf32, #tpu.memory_space<vmem>>, vector<16x32xf32>,
    return
  }
  func.func @transform_0(%arg0: i32) -> (i32, i32) {
    %c0_i32 = arith.constant 0 : i32
    %c0_i32_0 = arith.constant 0 : i32
    return %arg0, %c0_i32 : i32, i32
  }
  func.func @transform_1(%arg0: i32) -> (i32, i32) {
    %c0_i32 = arith.constant 0 : i32
    %c0_i32_0 = arith.constant 0 : i32
    %c0_i32_1 = arith.constant 0 : i32
    return %c0_i32, %c0_i32_0 : i32, i32
  }
  func.func @transform_2(%arg0: i32) -> (i32, i32) {
    %c0_i32 = arith.constant 0 : i32
    %c0_i32_0 = arith.constant 0 : i32
    %c0_i32_1 = arith.constant 0 : i32
    return %c0_i32, %c0_i32_0 : i32, i32
  }
  func.func @transform_3(%arg0: i32) -> (i32, i32) {
    %c0_i32 = arith.constant 0 : i32
    %c0_i32_0 = arith.constant 0 : i32
    return %arg0, %c0_i32 : i32, i32
  }
}

</mosaic_0001>

<llo_original>
// kernel: tpu_custom_call.1
$region0: #{tpu_custom_call.1}
  #allocation0 [shape = 'u32[]', space=smem, size = 0x4, offset = 0x4, fixed_abs, tag = 'smem constant byte address 0x4 - core index']
  #allocation1 [shape = 'u32[144,128]{1,0:T(1,128)}', space=vmem, size = 0x12000, scoped, tag = 'internal scratch']
  %s0 = inlined_call_operand.hbm [shape: f32[16,32], index: 0, kind: input, shape index: {}]
  %s1 = inlined_call_operand.vmem [shape: f32[1,32], index: 1, kind: input, shape index: {}]
  %s2 = inlined_call_operand.vmem [shape: f32[1,32], index: 2, kind: input, shape index: {}]
  %s3 = inlined_call_operand.hbm [shape: f32[16,32], index: 3, kind: output, shape index: {}]
  %s4 = sld [smem:[#allocation0]]
  $region26: #{tpu_custom_call.1} parent=0
    _
  %s6 = ssub.s32 1, %s4
  %s7 = scalar_select 0, %s6, %s4
  $region1: #{tpu_custom_call.1} parent=0
    #allocation2 [shape = 'u8[8192]{0}', space=vmem, size = 0x2000, scoped, tag = 'input window, operand 0, single buffered']
    #allocation3 [shape = 's32[1]{0}', space=sflag, size = 0x4, scoped, tag = 'scoped memory for tpu_custom_call.1']
    #allocation4 [shape = 's32[1]{0}', space=sflag, size = 0x4, scoped, tag = 'scoped memory for tpu_custom_call.1']
    #allocation5 [shape = 'u8[8192]{0}', space=vmem, size = 0x2000, scoped, tag = 'output window, operand 0, single buffered']
    %8 = vsyncpa [#allocation3], 0
    %9 = vsyncpa [#allocation4], 0
    // Predicated region
    $region2: #{tpu_custom_call.1} parent=1 // pred_check
      _
    $region3: #{tpu_custom_call.1} parent=1 // pred_check_branch
      %11 = sbr.rel (0) target = $region5
    $region4: #{tpu_custom_call.1} parent=1 // pred_region
      %s13 = ssub.s32 256, 256
      %14 = vsyncadd [#allocation3], %s13
      %s15 = sshll.u32 [#allocation2], 4
      %s16 = int_to_ptr.vmem [resolvable:$true] %s15
      %21 = dma.hbm_to_vmem [thread:$0]  %s0, 256, %s16, [#allocation3], 128, 128, 8
    $region5: #{tpu_custom_call.1} parent=1 // pred_fallthru
      _
    // Predicated region
    $region6: #{tpu_custom_call.1} parent=1 // pred_check
      _
    $region7: #{tpu_custom_call.1} parent=1 // pred_check_branch
      %23 = sbr.rel (0) target = $region9
    $region8: #{tpu_custom_call.1} parent=1 // pred_region
      _
    $region9: #{tpu_custom_call.1} parent=1 // pred_fallthru
      _
    // Predicated region
    $region10: #{tpu_custom_call.1} parent=1 // pred_check
      _
    $region11: #{tpu_custom_call.1} parent=1 // pred_check_branch
      %25 = sbr.rel (0) target = $region13
    $region12: #{tpu_custom_call.1} parent=1 // pred_region
      _
    $region13: #{tpu_custom_call.1} parent=1 // pred_fallthru
      _
    // Predicated region
    $region14: #{tpu_custom_call.1} parent=1 // pred_check
      _
    $region15: #{tpu_custom_call.1} parent=1 // pred_check_branch
      %27 = sbr.rel (0) target = $region17
    $region16: #{tpu_custom_call.1} parent=1 // pred_region
      %28 = dma.done [#allocation3], 256
    $region17: #{tpu_custom_call.1} parent=1 // pred_fallthru
      _
    %v29 = vld [vmem:[#allocation2] sm:$0xff]
    %v30 = vld [vmem:[#allocation2 + $0x8] sm:$0xff]
    %vm31 = vcmask 261120
    %v32 = vsel %vm31, %v29, 0.0
    %33 = vadd.xlane.f32.xlu0 %v32
    %v34 = vpop.xlane.xlu0 %33
    %v35 = vsel %vm31, %v30, 0.0
    %36 = vadd.xlane.f32.xlu0 %v35
    %v37 = vpop.xlane.xlu0 %36
    %v38 = vrcp.pop 32.0
    %v39 = vmul.f32 %v34, %v38
    %v40 = vmul.f32 %v37, %v38
    %v41 = vsub.f32 %v29, %v39
    %v42 = vsub.f32 %v30, %v40
    %v43 = vmul.f32 %v41, %v41
    %v44 = vmul.f32 %v42, %v42
    %v45 = vsel %vm31, %v43, 0.0
    %46 = vadd.xlane.f32.xlu0 %v45
    %v47 = vpop.xlane.xlu0 %46
    %v48 = vsel %vm31, %v44, 0.0
    %49 = vadd.xlane.f32.xlu0 %v48
    %v50 = vpop.xlane.xlu0 %49
    %v51 = vmul.f32 %v47, 0.032258064
    %v52 = vmul.f32 %v50, 0.032258064
    %v53 = vrsqrt.pop %v51
    %v54 = vmul.f32 %v51, %v53
    %vm55 = vcmp.eq.f32.partialorder %v51, inf
    %v56 = vsel %vm55, %v51, %v54
    %vm57 = vcmp.eq.f32.partialorder %v51, 0.0
    %v58 = vand.u32 %v51, 2147483648
    %v59 = vsel %vm57, %v58, %v56
    %v60 = vrsqrt.pop %v52
    %v61 = vmul.f32 %v52, %v60
    %vm62 = vcmp.eq.f32.partialorder %v52, inf
    %v63 = vsel %vm62, %v52, %v61
    %vm64 = vcmp.eq.f32.partialorder %v52, 0.0
    %v65 = vand.u32 %v52, 2147483648
    %v66 = vsel %vm64, %v65, %v63
    %v67 = vadd.f32 %v59, 1e-06
    %v68 = vadd.f32 %v66, 1e-06
    %v69 = vrcp.pop %v67
    %v70 = vrcp.pop %v68
    %v71 = vld [vmem:[%s1] sm:$0x1]
    %v72 = vld [vmem:[%s2] sm:$0x1]
    %v73 = vmul.f32 %v41, %v69
    %v74 = vmul.f32 %v42, %v70
    %v76 = vlaneseq
    %v77 = vshrl.u32 %v76, 7
    %v78 = vsub.s32 0, %v77
    %v79 = vrot.slane %v71, %v78
    %v81 = vmul.f32 %v73, %v79
    %v82 = vmul.f32 %v74, %v79
    %v84 = vlaneseq
    %v85 = vshrl.u32 %v84, 7
    %v86 = vsub.s32 0, %v85
    %v87 = vrot.slane %v72, %v86
    %v89 = vadd.f32 %v81, %v87
    %v90 = vadd.f32 %v82, %v87
    %91 = vst.msk [vmem:[#allocation5] sm:$0xff] %vm31, %v89
    %92 = vst.msk [vmem:[#allocation5 + $0x8] sm:$0xff] %vm31, %v90
    // Predicated region
    $region18: #{tpu_custom_call.1} parent=1 // pred_check
      _
    $region19: #{tpu_custom_call.1} parent=1 // pred_check_branch
      %94 = sbr.rel (0) target = $region21
    $region20: #{tpu_custom_call.1} parent=1 // pred_region
      %s96 = ssub.s32 256, 256
      %97 = vsyncadd [#allocation4], %s96
      %s98 = sshll.u32 [#allocation5], 4
      %s99 = int_to_ptr.vmem [resolvable:$true] %s98
      %104 = dma.vmem_to_hbm [thread:$0]  %s99, 256, %s3, [#allocation4], 128, 128, 8
    $region21: #{tpu_custom_call.1} parent=1 // pred_fallthru
      _
    // Predicated region
    $region22: #{tpu_custom_call.1} parent=1 // pred_check
      _
    $region23: #{tpu_custom_call.1} parent=1 // pred_check_branch
      %106 = sbr.rel (0) target = $region25
    $region24: #{tpu_custom_call.1} parent=1 // pred_region
      %107 = dma.done [#allocation4], 256
    $region25: #{tpu_custom_call.1} parent=1 // pred_fallthru
      _
    %108 = vsyncpa [#allocation3], 1
    %109 = vsyncpa [#allocation4], 1

</llo_original>
